<compile_context>
chip_gen: v7x
topology: tpu7x:2x2x1
jax: 0.10.0
libtpu: 0.0.40
codegen_flags: <defaults>
</compile_context>

<pallas_src>
import functools

import jax
import jax.numpy as jnp
from jax.experimental import pallas as pl
from jax.experimental.pallas import tpu as pltpu

LANE = 128                                # lane width (last dim of every tile)
TWO_PASS_TILE_BYTES = 2 * 1024 * 1024     # ~2 MiB per stream per buffer
_FALLBACK_VMEM_BYTES = 64 * 1024 * 1024   # v7x per-TensorCore VMEM (smallest)

_VMEM_CAP_CACHE = [None]


def _vmem_capacity_bytes():
    """Per-TensorCore VMEM capacity, queried once at trace time."""
    if _VMEM_CAP_CACHE[0] is None:
        try:
            _VMEM_CAP_CACHE[0] = int(pltpu.get_tpu_info().vmem_capacity_bytes)
        except Exception:
            _VMEM_CAP_CACHE[0] = _FALLBACK_VMEM_BYTES  # conservative (v7x)
    return _VMEM_CAP_CACHE[0]


def _sublane_multiple(dtype):
    """Second-to-last block dim alignment: 8 (32-bit), 16 (16-bit), 32 (8-bit)."""
    itemsize = jnp.dtype(dtype).itemsize
    return max(8, 8 * (4 // max(itemsize, 1)))


# ---------------------------------------------------------------------------
# Kernels
# ---------------------------------------------------------------------------

def _fused_kernel(base_ref, x_ref, out_ref, *, eps):
    """Single pass: whole (rows, LANE) slab resident in VMEM (3N HBM bytes)."""
    xv = x_ref[...].astype(jnp.float32)
    d = base_ref[...].astype(jnp.float32) - xv
    norm = jnp.sqrt(jnp.sum(d * d))
    # Guard the divide so the unselected branch never produces inf/nan.
    scale = jnp.where(norm > eps,
                      eps / jnp.maximum(norm, jnp.float32(1e-30)),
                      jnp.float32(1.0))
    out_ref[...] = (xv + scale * d).astype(out_ref.dtype)


def _sumsq_kernel(base_ref, x_ref, part_ref, *, tr, n_half, num_full):
    """Pass 1: partial sum((base - x)^2).

    Grid is (2, n_half): the leading "parallel" axis splits the tiles into two
    halves (one per TensorCore on v7x); each half accumulates into its own
    resident (8, LANE) f32 output block.
    """
    c = pl.program_id(0)
    i = pl.program_id(1)

    @pl.when(i == 0)
    def _():
        part_ref[...] = jnp.zeros_like(part_ref)

    def accumulate():
        d = base_ref[...].astype(jnp.float32) - x_ref[...].astype(jnp.float32)
        dd = d * d
        # Layout-preserving (tr//8, 8, LANE) view: the axis-0 sum is pure VPU
        # vreg adds; the single cross-lane reduce is deferred to pass 2.
        part_ref[...] += dd.reshape(tr // 8, 8, LANE).sum(axis=0)

    if 2 * n_half > num_full:
        # Odd tile count: the second half sees one clamped duplicate tile
        # (kept in-bounds by the index_map); skip its contribution.
        pl.when(c * n_half + i < num_full)(accumulate)
    else:
        accumulate()


def _apply_kernel(part_ref, base_ref, x_ref, out_ref, *, eps):
    """Pass 2: out = x + scale * (base - x), scale from the global norm."""
    norm = jnp.sqrt(jnp.sum(part_ref[...]))
    scale = jnp.where(norm > eps,
                      eps / jnp.maximum(norm, jnp.float32(1e-30)),
                      jnp.float32(1.0))
    xv = x_ref[...].astype(jnp.float32)
    d = base_ref[...].astype(jnp.float32) - xv
    out_ref[...] = (xv + scale * d).astype(out_ref.dtype)


# ---------------------------------------------------------------------------
# Wrapper
# ---------------------------------------------------------------------------

def _choose_tr(rows, sub, max_tr):
    """Two-pass tile rows: prefer an evenly-dividing tile (no tail work);
    otherwise keep the large fixed tile (no TR=8 cliff) and let the wrapper
    reduce the small tail."""
    max_tr = max(sub, (max_tr // sub) * sub)
    if rows <= max_tr:
        return max(sub, (rows // sub) * sub)
    floor = max(sub, (max_tr // 4 // sub) * sub)
    t = max_tr
    while t >= floor:
        if rows % t == 0:
            return t
        t -= sub
    return max_tr


def l2clip_forward(base, x, eps=16.0 / 255.0, *, block_rows=None,
                   force_two_pass=False):
    """Pallas implementation of L2Clip.forward.

    Note: call eagerly or with eps/block_rows/force_two_pass static under jit.
    """
    assert base.shape == x.shape, "base / x shape mismatch"
    orig_shape = x.shape
    orig_dtype = x.dtype
    eps = float(eps)              # compile-time constant (not a traced scalar)

    total = int(x.size)
    if total == 0:
        return x

    itemsize = jnp.dtype(orig_dtype).itemsize
    sub = _sublane_multiple(orig_dtype)

    rows = -(-total // LANE)      # ceil(total / LANE)
    padded = rows * LANE

    xf = jnp.ravel(x)
    bf = jnp.ravel(base)
    if padded != total:
        # TODO(synk): handle this sub-lane ragged tail in-kernel (masked
        # store) to kill the two small copies below; only hit when
        # total % 128 != 0, and the zero pad (< 512 B) leaves the norm intact.
        xf = jnp.pad(xf, (0, padded - total))
        bf = jnp.pad(bf, (0, padded - total))
    x2 = xf.reshape(rows, LANE)
    b2 = bf.reshape(rows, LANE)

    vmem_cap = _vmem_capacity_bytes()
    vmem_limit = int(vmem_cap * 0.85)
    # Fused-path VMEM estimate: base + x + out buffers plus ~6 live f32
    # temporaries per element (conservative); keep it under ~60% of VMEM.
    fused_bytes = padded * (3 * itemsize + 6 * 4)
    use_fused = (not force_two_pass) and fused_bytes <= (vmem_cap * 3) // 5

    if use_fused:
        # Single fused pass: one HBM read of each input, one write of the
        # output (the 3N traffic floor).
        out2 = pl.pallas_call(
            functools.partial(_fused_kernel, eps=eps),
            out_shape=jax.ShapeDtypeStruct((rows, LANE), orig_dtype),
            compiler_params=pltpu.CompilerParams(
                vmem_limit_bytes=vmem_limit),
        )(b2, x2)
    else:
        max_tr = max(sub, (TWO_PASS_TILE_BYTES // (LANE * itemsize) // sub) * sub)
        if block_rows is not None:
            tr = max(sub, (int(block_rows) // sub) * sub)
        else:
            tr = _choose_tr(rows, sub, max_tr)

        num_full = rows // tr             # full (in-bounds) tiles for pass 1
        rem = rows - num_full * tr

        if num_full > 0:
            n_half = -(-num_full // 2)    # tiles per half / per core
            clamp = (2 * n_half > num_full)

            def tile_map(c, i):
                t = c * n_half + i
                if clamp:                 # static: only when num_full is odd
                    t = jnp.minimum(t, num_full - 1)
                return (t, 0)

            # Pass 1: per-half partial sums of squares.
            partials = pl.pallas_call(
                functools.partial(_sumsq_kernel, tr=tr, n_half=n_half,
                                  num_full=num_full),
                out_shape=jax.ShapeDtypeStruct((2 * 8, LANE), jnp.float32),
                grid_spec=pltpu.PrefetchScalarGridSpec(
                    num_scalar_prefetch=0,
                    grid=(2, n_half),
                    in_specs=[pl.BlockSpec((tr, LANE), tile_map),
                              pl.BlockSpec((tr, LANE), tile_map)],
                    out_specs=pl.BlockSpec((8, LANE), lambda c, i: (c, 0)),
                ),
                compiler_params=pltpu.CompilerParams(
                    dimension_semantics=("parallel", "arbitrary"),
                    vmem_limit_bytes=vmem_limit),
            )(b2, x2)
        else:
            partials = jnp.zeros((2 * 8, LANE), jnp.float32)

        if rem:
            # Tail rows not covered by full tiles (rare: only when `rows` has
            # no good divisor).  Tiny (< one tile) jnp reduction keeps pass 1
            # free of ragged / out-of-bounds blocks.
            d_tail = (b2[num_full * tr:].astype(jnp.float32) -
                      x2[num_full * tr:].astype(jnp.float32))
            partials = partials.at[0, 0].add(jnp.sum(d_tail * d_tail))

        # Pass 2: elementwise rescale + add, parallel over lane-dense tiles.
        # The tiny partial-sum block is loaded once per core and reduced
        # in-kernel (no extra HBM round-trip for the scalar).
        num_tiles = -(-rows // tr)
        out2 = pl.pallas_call(
            functools.partial(_apply_kernel, eps=eps),
            out_shape=jax.ShapeDtypeStruct((rows, LANE), orig_dtype),
            grid_spec=pltpu.PrefetchScalarGridSpec(
                num_scalar_prefetch=0,
                grid=(num_tiles,),
                in_specs=[pl.BlockSpec((2 * 8, LANE), lambda i: (0, 0)),
                          pl.BlockSpec((tr, LANE), lambda i: (i, 0)),
                          pl.BlockSpec((tr, LANE), lambda i: (i, 0))],
                out_specs=pl.BlockSpec((tr, LANE), lambda i: (i, 0)),
            ),
            compiler_params=pltpu.CompilerParams(
                dimension_semantics=("parallel",),
                vmem_limit_bytes=vmem_limit),
        )(partials, b2, x2)

    if padded != total:
        out = out2.reshape(-1)[:total].reshape(orig_shape)
    else:
        out = out2.reshape(orig_shape)
    return out


# ---------------------------------------------------------------------------
# Reference + self-test
# ---------------------------------------------------------------------------

def _reference(base, x, eps=16.0 / 255.0):
    delta = base.astype(jnp.float32) - x.astype(jnp.float32)
    norm = jnp.sqrt(jnp.sum(delta * delta))
    scale = jnp.where(norm > eps, eps / norm, 1.0)
    return (x.astype(jnp.float32) + scale * delta).astype(x.dtype)


if __name__ == "__main__":
    key = jax.random.PRNGKey(0)
    k_base, k_x, k_b2, k_x2, k_b3, k_x3 = jax.random.split(key, 6)
    eps = 16.0 / 255.0

    # Main case: adversarial-image shapes (NCHW), fused single-pass path.
    shape = (2, 4, 16, 16)
    base = jax.random.uniform(k_base, shape, dtype=jnp.float32)
    x = base + 0.05 * jax.random.normal(k_x, shape, dtype=jnp.float32)
    out = jax.block_until_ready(l2clip_forward(base, x, eps))
    ref = _reference(base, x, eps)
    assert out.shape == x.shape and out.dtype == x.dtype
    assert jnp.allclose(out, ref, atol=1e-5, rtol=1e-5), "fused mismatch"

    # Exercise the two-pass (sumsq + apply) path on small inputs by forcing it
    # with a small tile:
    #  (a) odd tile count -> 2-core split + clamped duplicate tile,
    #  (b) tile not dividing rows -> wrapper tail reduce + ragged apply tile.
    for shp, blk in (((6, 4, 32, 32), 64),    # rows=192, tr=64 -> 3 tiles
                     ((5, 3, 32, 32), 64)):   # rows=120, tr=64 -> tail of 56
        b = jax.random.uniform(k_b2, shp, dtype=jnp.float32)
        xx = b + 0.02 * jax.random.normal(k_x2, shp, dtype=jnp.float32)
        o = jax.block_until_ready(
            l2clip_forward(b, xx, eps, block_rows=blk, force_two_pass=True))
        r = _reference(b, xx, eps)
        assert jnp.allclose(o, r, atol=1e-5, rtol=1e-5), f"two-pass mismatch {shp}"

    # norm <= eps branch (delta passes through unchanged).
    x_small = base + 1e-4 * jax.random.normal(k_x3, shape, dtype=jnp.float32)
    o2 = jax.block_until_ready(l2clip_forward(base, x_small, eps))
    r2 = _reference(base, x_small, eps)
    assert jnp.allclose(o2, r2, atol=1e-6, rtol=1e-6), "small-norm mismatch"

    # total % 128 != 0 -> small-pad fallback path.
    shp3 = (2, 3, 7, 9)
    b3 = jax.random.uniform(k_b3, shp3, dtype=jnp.float32)
    x3 = b3 + 0.05 * jax.random.normal(k_x3, shp3, dtype=jnp.float32)
    o3 = jax.block_until_ready(l2clip_forward(b3, x3, eps))
    r3 = _reference(b3, x3, eps)
    assert jnp.allclose(o3, r3, atol=1e-5, rtol=1e-5), "ragged-total mismatch"

    print("KERNEL_OK")
</pallas_src>

<mosaic_0001>
module attributes {stable_mosaic.version = 11 : i64} {
  func.func @_fused_kernel(%arg0: memref<16x128xf32, #tpu.memory_space<vmem>>, %arg1: memref<16x128xf32, #tpu.memory_space<vmem>>, %arg2: memref<16x128xf32, #tpu.memory_space<vmem>>) attributes {dimension_semantics = [], scalar_prefetch = 0 : i64, scratch_operands = 0 : i64, tpu.core_type = #tpu.core_type<tc>} {
    %c0 = arith.constant 0 : index
    %c0_0 = arith.constant 0 : index
    %0 = vector.load %arg1[%c0, %c0_0] : memref<16x128xf32, #tpu.memory_space<vmem>>, vector<16x128xf32>
    %c0_1 = arith.constant 0 : index
    %c0_2 = arith.constant 0 : index
    %1 = vector.load %arg0[%c0_1, %c0_2] : memref<16x128xf32, #tpu.memory_space<vmem>>, vector<16x128xf32>
    %2 = arith.subf %1, %0 : vector<16x128xf32>
    %3 = arith.mulf %2, %2 : vector<16x128xf32>
    %4 = vector.shape_cast %3 : vector<16x128xf32> to vector<1x16x128xf32>
    %cst = arith.constant dense<0.000000e+00> : vector<1xf32>
    %5 = vector.multi_reduction <add>, %4, %cst [1, 2] : vector<1x16x128xf32> to vector<1xf32>
    %6 = vector.shape_cast %5 : vector<1xf32> to vector<1x1x1xf32>
    %7 = vector.extract %6[0, 0, 0] : f32 from vector<1x1x1xf32>
    %8 = math.sqrt %7 : f32
    %cst_3 = arith.constant 6.274510e-02 : f32
    %9 = arith.cmpf ogt, %8, %cst_3 : f32
    %cst_4 = arith.constant 1.000000e-30 : f32
    %10 = arith.maximumf %8, %cst_4 : f32
    %cst_5 = arith.constant 6.274510e-02 : f32
    %11 = arith.divf %cst_5, %10 : f32
    %cst_6 = arith.constant 1.000000e+00 : f32
    %12 = arith.select %9, %11, %cst_6 : f32
    %13 = vector.broadcast %12 : f32 to vector<16x128xf32>
    %14 = arith.mulf %13, %2 : vector<16x128xf32>
    %15 = arith.addf %0, %14 : vector<16x128xf32>
    %c0_7 = arith.constant 0 : index
    %c0_8 = arith.constant 0 : index
    %16 = vector.load %arg2[%c0_7, %c0_8] : memref<16x128xf32, #tpu.memory_space<vmem>>, vector<16x128xf32>
    tpu.vector_store %arg2[%c0_7, %c0_8], %15 {strides = array<i32>} : memref<16x128xf32, #tpu.memory_space<vmem>>, vector<16x128xf32>,
    return
  }
}

</mosaic_0001>

<llo_original>
// kernel: tpu_custom_call.1
$region0: #{tpu_custom_call.1}
  #allocation0 [shape = 'u32[]', space=smem, size = 0x4, offset = 0x4, fixed_abs, tag = 'smem constant byte address 0x4 - core index']
  #allocation1 [shape = 'u32[144,128]{1,0:T(1,128)}', space=vmem, size = 0x12000, scoped, tag = 'internal scratch']
  %s0 = inlined_call_operand.hbm [shape: f32[16,128], index: 0, kind: input, shape index: {}]
  %s1 = inlined_call_operand.hbm [shape: f32[16,128], index: 1, kind: input, shape index: {}]
  %s2 = inlined_call_operand.hbm [shape: f32[16,128], index: 2, kind: output, shape index: {}]
  %s3 = sld [smem:[#allocation0]]
  $region26: #{tpu_custom_call.1} parent=0
    _
  %s5 = ssub.s32 1, %s3
  %s6 = scalar_select 0, %s5, %s3
  $region1: #{tpu_custom_call.1} parent=0
    #allocation2 [shape = 'u8[8192]{0}', space=vmem, size = 0x2000, scoped, tag = 'input window, operand 0, single buffered']
    #allocation3 [shape = 's32[1]{0}', space=sflag, size = 0x4, scoped, tag = 'scoped memory for tpu_custom_call.1']
    #allocation4 [shape = 's32[1]{0}', space=sflag, size = 0x4, scoped, tag = 'scoped memory for tpu_custom_call.1']
    #allocation5 [shape = 'u8[8192]{0}', space=vmem, size = 0x2000, scoped, tag = 'input window, operand 1, single buffered']
    #allocation6 [shape = 's32[1]{0}', space=sflag, size = 0x4, scoped, tag = 'scoped memory for tpu_custom_call.1']
    #allocation7 [shape = 'u8[8192]{0}', space=vmem, size = 0x2000, scoped, tag = 'output window, operand 0, single buffered']
    %7 = vsyncpa [#allocation3], 0
    %8 = vsyncpa [#allocation6], 0
    %9 = vsyncpa [#allocation4], 0
    // Predicated region
    $region2: #{tpu_custom_call.1} parent=1 // pred_check
      _
    $region3: #{tpu_custom_call.1} parent=1 // pred_check_branch
      %11 = sbr.rel (0) target = $region5
    $region4: #{tpu_custom_call.1} parent=1 // pred_region
      %s13 = ssub.s32 256, 256
      %14 = vsyncadd [#allocation3], %s13
      %s15 = sshll.u32 [#allocation2], 4
      %s16 = int_to_ptr.vmem [resolvable:$true] %s15
      %21 = dma.hbm_to_vmem [thread:$0]  %s0, 256, %s16, [#allocation3], 128, 128, 8
    $region5: #{tpu_custom_call.1} parent=1 // pred_fallthru
      _
    // Predicated region
    $region6: #{tpu_custom_call.1} parent=1 // pred_check
      _
    $region7: #{tpu_custom_call.1} parent=1 // pred_check_branch
      %23 = sbr.rel (0) target = $region9
    $region8: #{tpu_custom_call.1} parent=1 // pred_region
      %s25 = ssub.s32 256, 256
      %26 = vsyncadd [#allocation6], %s25
      %s27 = sshll.u32 [#allocation5], 4
      %s28 = int_to_ptr.vmem [resolvable:$true] %s27
      %33 = dma.hbm_to_vmem [thread:$0]  %s1, 256, %s28, [#allocation6], 128, 128, 8
    $region9: #{tpu_custom_call.1} parent=1 // pred_fallthru
      _
    // Predicated region
    $region10: #{tpu_custom_call.1} parent=1 // pred_check
      _
    $region11: #{tpu_custom_call.1} parent=1 // pred_check_branch
      %35 = sbr.rel (0) target = $region13
    $region12: #{tpu_custom_call.1} parent=1 // pred_region
      %36 = dma.done [#allocation3], 256
    $region13: #{tpu_custom_call.1} parent=1 // pred_fallthru
      _
    // Predicated region
    $region14: #{tpu_custom_call.1} parent=1 // pred_check
      _
    $region15: #{tpu_custom_call.1} parent=1 // pred_check_branch
      %38 = sbr.rel (0) target = $region17
    $region16: #{tpu_custom_call.1} parent=1 // pred_region
      %39 = dma.done [#allocation6], 256
    $region17: #{tpu_custom_call.1} parent=1 // pred_fallthru
      _
    %v40 = vld [vmem:[#allocation5] sm:$0xff]
    %v41 = vld [vmem:[#allocation5 + $0x8] sm:$0xff]
    %v42 = vld [vmem:[#allocation2] sm:$0xff]
    %v43 = vld [vmem:[#allocation2 + $0x8] sm:$0xff]
    %v44 = vsub.f32 %v42, %v40
    %v45 = vsub.f32 %v43, %v41
    %v46 = vmul.f32 %v44, %v44
    %v47 = vmul.f32 %v45, %v45
    %v48 = vadd.f32 %v46, %v47
    %49 = vadd.xlane.f32.xlu0 %v48
    %v50 = vpop.xlane.xlu0 %49
    %v51 = vrot.slane %v50, 4
    %v52 = vadd.f32 %v50, %v51
    %v53 = vrot.slane %v52, 2
    %v54 = vadd.f32 %v52, %v53
    %v55 = vrot.slane %v54, 1
    %v56 = vadd.f32 %v54, %v55
    %s57 = vtos %v56
    %v58 = vstv %s57
    %v59 = vrsqrt.pop %v58
    %v60 = vmul.f32 %v58, %v59
    %vm61 = vcmp.eq.f32.partialorder %v58, inf
    %v62 = vsel %vm61, %v58, %v60
    %vm63 = vcmp.eq.f32.partialorder %v58, 0.0
    %v64 = vand.u32 %v58, 2147483648
    %v65 = vsel %vm63, %v64, %v62
    %s66 = vtos %v65
    %p67 = scmp.gt.f32.partialorder %s66, 0.0627451
    %s68 = smax.f32 %s66, 1e-30
    %v69 = vstv %s68
    %v70 = vrcp.pop %v69
    %s71 = vtos %v70
    %s72 = smul.f32 0.0627451, %s71
    %s73 = scalar_select %p67, %s72, 1.0
    %v74 = vstv %s73
    %v75 = vmul.f32 %v74, %v44
    %v76 = vmul.f32 %v74, %v45
    %v77 = vadd.f32 %v40, %v75
    %v78 = vadd.f32 %v41, %v76
    %79 = vst [vmem:[#allocation7] sm:$0xff] %v77
    %80 = vst [vmem:[#allocation7 + $0x8] sm:$0xff] %v78
    // Predicated region
    $region18: #{tpu_custom_call.1} parent=1 // pred_check
      _
    $region19: #{tpu_custom_call.1} parent=1 // pred_check_branch
      %82 = sbr.rel (0) target = $region21
    $region20: #{tpu_custom_call.1} parent=1 // pred_region
      %s84 = ssub.s32 256, 256
      %85 = vsyncadd [#allocation4], %s84
      %s86 = sshll.u32 [#allocation7], 4
      %s87 = int_to_ptr.vmem [resolvable:$true] %s86
      %92 = dma.vmem_to_hbm [thread:$0]  %s87, 256, %s2, [#allocation4], 128, 128, 8
    $region21: #{tpu_custom_call.1} parent=1 // pred_fallthru
      _
    // Predicated region
    $region22: #{tpu_custom_call.1} parent=1 // pred_check
      _
    $region23: #{tpu_custom_call.1} parent=1 // pred_check_branch
      %94 = sbr.rel (0) target = $region25
    $region24: #{tpu_custom_call.1} parent=1 // pred_region
      %95 = dma.done [#allocation4], 256
    $region25: #{tpu_custom_call.1} parent=1 // pred_fallthru
      _
    %96 = vsyncpa [#allocation3], 1
    %97 = vsyncpa [#allocation6], 1
    %98 = vsyncpa [#allocation4], 1

</llo_original>
